<compile_context>
chip_gen: v7x
topology: tpu7x:2x2x1
jax: 0.10.0
libtpu: 0.0.40
codegen_flags: <defaults>
</compile_context>

<pallas_src>
import jax
import jax.numpy as jnp
from jax.experimental import pallas as pl
from jax.experimental.pallas import tpu as pltpu

IN_F = 80     # x features; layer1 = Linear(81 -> 100) once the ones column is added
HID_F = 100   # hidden features; layer2 = Linear(101 -> 80)
OUT_F = 80
LANE = 128    # native lane width; pad all last dims to this


def _mlp_kernel(x_ref, w1_ref, b1_ref, w2_ref, b2_ref, out_ref, hid_ref):
    # x_ref : (bt, 128)   zero-padded past column IN_F
    # w1_ref: (128, 128)  zero-padded from (80, 100);  b1_ref: (1, 128)
    # w2_ref: (128, 128)  zero-padded from (100, 80);  b2_ref: (1, 128)
    x = x_ref[...]
    h = jax.nn.sigmoid(
        jnp.dot(x, w1_ref[...], preferred_element_type=jnp.float32) + b1_ref[...]
    )
    # Padded hidden lanes hold sigmoid(0)=0.5 but only ever multiply zero-padded
    # rows of w2, so the valid output lanes are exact.
    o = jax.nn.sigmoid(
        jnp.dot(h, w2_ref[...], preferred_element_type=jnp.float32) + b2_ref[...]
    )
    out_ref[...] = o.astype(out_ref.dtype)
    hid_ref[...] = h.astype(hid_ref.dtype)


def _round_up(n, m):
    return ((n + m - 1) // m) * m


def _pad2d(a, rows, cols):
    return jnp.pad(a, ((0, rows - a.shape[0]), (0, cols - a.shape[1])))


def neural_network_forward(x, w1_t, b1, w2_t, b2, *, block_b=1024):
    """x: (B, 80); w1_t: (81, 100); b1: (100,); w2_t: (101, 80); b2: (80,).

    Weights are the torch Linear weights pre-transposed to [in_features, out_features].
    Returns (output (B, 80), hidden (B, 100)) like the torch module.
    """
    B = x.shape[0]
    dt = x.dtype

    # Fold the ones-column into the bias: cat([x, 1]) @ W == x @ W[:-1] + W[-1].
    w1 = w1_t[:IN_F, :]
    b1_eff = (b1 + w1_t[IN_F, :]).reshape(1, HID_F)
    w2 = w2_t[:HID_F, :]
    b2_eff = (b2 + w2_t[HID_F, :]).reshape(1, OUT_F)

    # Lane-pad everything to 128 and tile the batch.
    bt = min(block_b, _round_up(B, 8))          # >= 8 rows, <= block_b
    b_pad = _round_up(B, bt)
    x_p = _pad2d(x, b_pad, LANE)
    w1_p = _pad2d(w1.astype(dt), LANE, LANE)
    b1_p = _pad2d(b1_eff.astype(dt), 1, LANE)
    w2_p = _pad2d(w2.astype(dt), LANE, LANE)
    b2_p = _pad2d(b2_eff.astype(dt), 1, LANE)

    grid = (b_pad // bt,)
    row_spec = pl.BlockSpec((bt, LANE), lambda i: (i, 0))
    w_spec = pl.BlockSpec((LANE, LANE), lambda i: (0, 0))
    b_spec = pl.BlockSpec((1, LANE), lambda i: (0, 0))

    out_p, hid_p = pl.pallas_call(
        _mlp_kernel,
        out_shape=(
            jax.ShapeDtypeStruct((b_pad, LANE), dt),
            jax.ShapeDtypeStruct((b_pad, LANE), dt),
        ),
        grid=grid,
        in_specs=[row_spec, w_spec, b_spec, w_spec, b_spec],
        out_specs=(row_spec, row_spec),
        compiler_params=pltpu.CompilerParams(
            dimension_semantics=("parallel",),
        ),
    )(x_p, w1_p, b1_p, w2_p, b2_p)

    return out_p[:B, :OUT_F], hid_p[:B, :HID_F]


def _reference(x, w1_t, b1, w2_t, b2):
    B = x.shape[0]
    ones = jnp.ones((B, 1), x.dtype)
    a = jnp.concatenate([x, ones], axis=1)
    hidden = jax.nn.sigmoid(a @ w1_t + b1)
    a2 = jnp.concatenate([hidden, ones], axis=1)
    output = jax.nn.sigmoid(a2 @ w2_t + b2)
    return output, hidden


if __name__ == "__main__":
    key = jax.random.PRNGKey(0)
    kx, k1, k2, k3, k4 = jax.random.split(key, 5)

    B = 2
    x = jax.random.normal(kx, (B, IN_F), dtype=jnp.float32)

    # Deterministic torch-Linear-style init, stored pre-transposed [in, out].
    bound1 = 1.0 / jnp.sqrt(jnp.float32(IN_F + 1))    # layer1: Linear(81, 100)
    bound2 = 1.0 / jnp.sqrt(jnp.float32(HID_F + 1))   # layer2: Linear(101, 80)
    w1_t = jax.random.uniform(k1, (IN_F + 1, HID_F), jnp.float32, -bound1, bound1)
    b1 = jax.random.uniform(k2, (HID_F,), jnp.float32, -bound1, bound1)
    w2_t = jax.random.uniform(k3, (HID_F + 1, OUT_F), jnp.float32, -bound2, bound2)
    b2 = jax.random.uniform(k4, (OUT_F,), jnp.float32, -bound2, bound2)

    output, hidden = neural_network_forward(x, w1_t, b1, w2_t, b2)
    jax.block_until_ready((output, hidden))

    ref_out, ref_hid = _reference(x, w1_t, b1, w2_t, b2)
    assert output.shape == (B, OUT_F) and hidden.shape == (B, HID_F)
    assert jnp.allclose(output, ref_out, atol=1e-5, rtol=1e-5)
    assert jnp.allclose(hidden, ref_hid, atol=1e-5, rtol=1e-5)

    print("KERNEL_OK")
</pallas_src>

<mosaic_0001>
module attributes {stable_mosaic.version = 11 : i64} {
  func.func @_mlp_kernel(%arg0: i32, %arg1: memref<8x128xf32, #tpu.memory_space<vmem>>, %arg2: memref<128x128xf32, #tpu.memory_space<vmem>>, %arg3: memref<1x128xf32, #tpu.memory_space<vmem>>, %arg4: memref<128x128xf32, #tpu.memory_space<vmem>>, %arg5: memref<1x128xf32, #tpu.memory_space<vmem>>, %arg6: memref<8x128xf32, #tpu.memory_space<vmem>>, %arg7: memref<8x128xf32, #tpu.memory_space<vmem>>) attributes {dimension_semantics = [#tpu.dimension_semantics<parallel>], iteration_bounds = array<i64: 1>, scalar_prefetch = 0 : i64, scratch_operands = 0 : i64, tpu.core_type = #tpu.core_type<tc>, window_params = [{transform_indices = @transform_0, window_bounds = array<i64: 8, 128>}, {pipeline_mode = #tpu.pipeline_mode<synchronous>, transform_indices = @transform_1, window_bounds = array<i64: 128, 128>}, {pipeline_mode = #tpu.pipeline_mode<synchronous>, transform_indices = @transform_2, window_bounds = array<i64: 1, 128>}, {pipeline_mode = #tpu.pipeline_mode<synchronous>, transform_indices = @transform_3, window_bounds = array<i64: 128, 128>}, {pipeline_mode = #tpu.pipeline_mode<synchronous>, transform_indices = @transform_4, window_bounds = array<i64: 1, 128>}, {transform_indices = @transform_5, window_bounds = array<i64: 8, 128>}, {transform_indices = @transform_6, window_bounds = array<i64: 8, 128>}]} {
    %c0 = arith.constant 0 : index
    %c0_0 = arith.constant 0 : index
    %0 = vector.load %arg1[%c0, %c0_0] : memref<8x128xf32, #tpu.memory_space<vmem>>, vector<8x128xf32>
    %c0_1 = arith.constant 0 : index
    %c0_2 = arith.constant 0 : index
    %1 = vector.load %arg2[%c0_1, %c0_2] : memref<128x128xf32, #tpu.memory_space<vmem>>, vector<128x128xf32>
    %cst = arith.constant dense<0.000000e+00> : vector<8x128xf32>
    %2 = tpu.matmul %0, %1, %cst {dimension_numbers = #tpu.dot_dimension_numbers<[1], [0], [0], [1], [0, 0, 1, 1], [], []>} : vector<8x128xf32>, vector<128x128xf32>, vector<8x128xf32> -> vector<8x128xf32>
    %c0_3 = arith.constant 0 : index
    %c0_4 = arith.constant 0 : index
    %3 = vector.load %arg3[%c0_3, %c0_4] : memref<1x128xf32, #tpu.memory_space<vmem>>, vector<1x128xf32>
    %4 = vector.broadcast %3 : vector<1x128xf32> to vector<8x128xf32>
    %5 = arith.addf %2, %4 : vector<8x128xf32>
    %6 = arith.negf %5 : vector<8x128xf32>
    %7 = math.exp %6 : vector<8x128xf32>
    %cst_5 = arith.constant 1.000000e+00 : f32
    %8 = vector.broadcast %cst_5 : f32 to vector<8x128xf32>
    %9 = arith.addf %8, %7 : vector<8x128xf32>
    %10 = arith.divf %8, %9 : vector<8x128xf32>
    %c0_6 = arith.constant 0 : index
    %c0_7 = arith.constant 0 : index
    %11 = vector.load %arg4[%c0_6, %c0_7] : memref<128x128xf32, #tpu.memory_space<vmem>>, vector<128x128xf32>
    %cst_8 = arith.constant dense<0.000000e+00> : vector<8x128xf32>
    %12 = tpu.matmul %10, %11, %cst_8 {dimension_numbers = #tpu.dot_dimension_numbers<[1], [0], [0], [1], [0, 0, 1, 1], [], []>} : vector<8x128xf32>, vector<128x128xf32>, vector<8x128xf32> -> vector<8x128xf32>
    %c0_9 = arith.constant 0 : index
    %c0_10 = arith.constant 0 : index
    %13 = vector.load %arg5[%c0_9, %c0_10] : memref<1x128xf32, #tpu.memory_space<vmem>>, vector<1x128xf32>
    %14 = vector.broadcast %13 : vector<1x128xf32> to vector<8x128xf32>
    %15 = arith.addf %12, %14 : vector<8x128xf32>
    %16 = arith.negf %15 : vector<8x128xf32>
    %17 = math.exp %16 : vector<8x128xf32>
    %cst_11 = arith.constant 1.000000e+00 : f32
    %18 = vector.broadcast %cst_11 : f32 to vector<8x128xf32>
    %19 = arith.addf %18, %17 : vector<8x128xf32>
    %20 = arith.divf %18, %19 : vector<8x128xf32>
    %c0_12 = arith.constant 0 : index
    %c0_13 = arith.constant 0 : index
    %21 = vector.load %arg6[%c0_12, %c0_13] : memref<8x128xf32, #tpu.memory_space<vmem>>, vector<8x128xf32>
    tpu.vector_store %arg6[%c0_12, %c0_13], %20 {strides = array<i32>} : memref<8x128xf32, #tpu.memory_space<vmem>>, vector<8x128xf32>,
    %c0_14 = arith.constant 0 : index
    %c0_15 = arith.constant 0 : index
    %22 = vector.load %arg7[%c0_14, %c0_15] : memref<8x128xf32, #tpu.memory_space<vmem>>, vector<8x128xf32>
    tpu.vector_store %arg7[%c0_14, %c0_15], %10 {strides = array<i32>} : memref<8x128xf32, #tpu.memory_space<vmem>>, vector<8x128xf32>,
    return
  }
  func.func @transform_0(%arg0: i32) -> (i32, i32) {
    %c0_i32 = arith.constant 0 : i32
    %c0_i32_0 = arith.constant 0 : i32
    return %arg0, %c0_i32 : i32, i32
  }
  func.func @transform_1(%arg0: i32) -> (i32, i32) {
    %c0_i32 = arith.constant 0 : i32
    %c0_i32_0 = arith.constant 0 : i32
    %c0_i32_1 = arith.constant 0 : i32
    return %c0_i32, %c0_i32_0 : i32, i32
  }
  func.func @transform_2(%arg0: i32) -> (i32, i32) {
    %c0_i32 = arith.constant 0 : i32
    %c0_i32_0 = arith.constant 0 : i32
    %c0_i32_1 = arith.constant 0 : i32
    return %c0_i32, %c0_i32_0 : i32, i32
  }
  func.func @transform_3(%arg0: i32) -> (i32, i32) {
    %c0_i32 = arith.constant 0 : i32
    %c0_i32_0 = arith.constant 0 : i32
    %c0_i32_1 = arith.constant 0 : i32
    return %c0_i32, %c0_i32_0 : i32, i32
  }
  func.func @transform_4(%arg0: i32) -> (i32, i32) {
    %c0_i32 = arith.constant 0 : i32
    %c0_i32_0 = arith.constant 0 : i32
    %c0_i32_1 = arith.constant 0 : i32
    return %c0_i32, %c0_i32_0 : i32, i32
  }
  func.func @transform_5(%arg0: i32) -> (i32, i32) {
    %c0_i32 = arith.constant 0 : i32
    %c0_i32_0 = arith.constant 0 : i32
    return %arg0, %c0_i32 : i32, i32
  }
  func.func @transform_6(%arg0: i32) -> (i32, i32) {
    %c0_i32 = arith.constant 0 : i32
    %c0_i32_0 = arith.constant 0 : i32
    return %arg0, %c0_i32 : i32, i32
  }
}

</mosaic_0001>

<llo_original>
// kernel: tpu_custom_call.1
$region0: #{tpu_custom_call.1}
  #allocation0 [shape = 'u32[]', space=smem, size = 0x4, offset = 0x4, fixed_abs, tag = 'smem constant byte address 0x4 - core index']
  #allocation1 [shape = 'u32[144,128]{1,0:T(1,128)}', space=vmem, size = 0x12000, scoped, tag = 'internal scratch']
  %s0 = inlined_call_operand.hbm [shape: f32[8,128], index: 0, kind: input, shape index: {}]
  %s1 = inlined_call_operand.hbm [shape: f32[128,128], index: 1, kind: input, shape index: {}]
  %s2 = inlined_call_operand.vmem [shape: f32[1,128], index: 2, kind: input, shape index: {}]
  %s3 = inlined_call_operand.hbm [shape: f32[128,128], index: 3, kind: input, shape index: {}]
  %s4 = inlined_call_operand.vmem [shape: f32[1,128], index: 4, kind: input, shape index: {}]
  %s5 = inlined_call_operand.hbm [shape: f32[8,128], index: 5, kind: output, shape index: {0}]
  %s6 = inlined_call_operand.hbm [shape: f32[8,128], index: 6, kind: output, shape index: {1}]
  %7 = xla_tuple %s5, %s6
  %s8 = sld [smem:[#allocation0]]
  $region50: #{tpu_custom_call.1} parent=0
    _
  %s10 = ssub.s32 1, %s8
  %s11 = scalar_select 0, %s10, %s8
  $region1: #{tpu_custom_call.1} parent=0
    #allocation2 [shape = 'u8[4096]{0}', space=vmem, size = 0x1000, scoped, tag = 'input window, operand 0, single buffered']
    #allocation3 [shape = 's32[1]{0}', space=sflag, size = 0x4, scoped, tag = 'scoped memory for tpu_custom_call.1']
    #allocation4 [shape = 's32[1]{0}', space=sflag, size = 0x4, scoped, tag = 'scoped memory for tpu_custom_call.1']
    #allocation5 [shape = 'u8[65536]{0}', space=vmem, size = 0x10000, scoped, tag = 'input window, operand 1, single buffered']
    #allocation6 [shape = 's32[1]{0}', space=sflag, size = 0x4, scoped, tag = 'scoped memory for tpu_custom_call.1']
    #allocation7 [shape = 'u8[65536]{0}', space=vmem, size = 0x10000, scoped, tag = 'input window, operand 3, single buffered']
    #allocation8 [shape = 'u8[4096]{0}', space=vmem, size = 0x1000, scoped, tag = 'output window, operand 0, single buffered']
    #allocation9 [shape = 'u8[4096]{0}', space=vmem, size = 0x1000, scoped, tag = 'output window, operand 1, single buffered']
    #allocation10 [shape = 's32[1]{0}', space=sflag, size = 0x4, scoped, tag = 'scoped memory for tpu_custom_call.1']
    %12 = vsyncpa [#allocation3], 0
    %13 = vsyncpa [#allocation6], 0
    %14 = vsyncpa [#allocation4], 0
    %15 = vsyncpa [#allocation10], 0
    // Predicated region
    $region2: #{tpu_custom_call.1} parent=1 // pred_check
      _
    $region3: #{tpu_custom_call.1} parent=1 // pred_check_branch
      %17 = sbr.rel (0) target = $region5
    $region4: #{tpu_custom_call.1} parent=1 // pred_region
      %s19 = ssub.s32 128, 128
      %20 = vsyncadd [#allocation3], %s19
      %s22 = sshll.u32 [#allocation2], 4
      %s23 = int_to_ptr.vmem [resolvable:$true] %s22
      %25 = dma.hbm_to_vmem [thread:$0]  %s0, 128, %s23, [#allocation3]
    $region5: #{tpu_custom_call.1} parent=1 // pred_fallthru
      _
    // Predicated region
    $region6: #{tpu_custom_call.1} parent=1 // pred_check
      _
    $region7: #{tpu_custom_call.1} parent=1 // pred_check_branch
      %27 = sbr.rel (0) target = $region9
    $region8: #{tpu_custom_call.1} parent=1 // pred_region
      %s29 = ssub.s32 2048, 2048
      %30 = vsyncadd [#allocation6], %s29
      %s31 = sshll.u32 [#allocation5], 4
      %s32 = int_to_ptr.vmem [resolvable:$true] %s31
      %37 = dma.hbm_to_vmem [thread:$0]  %s1, 2048, %s32, [#allocation6], 128, 128, 8
    $region9: #{tpu_custom_call.1} parent=1 // pred_fallthru
      _
    // Predicated region
    $region10: #{tpu_custom_call.1} parent=1 // pred_check
      _
    $region11: #{tpu_custom_call.1} parent=1 // pred_check_branch
      %39 = sbr.rel (0) target = $region13
    $region12: #{tpu_custom_call.1} parent=1 // pred_region
      _
    $region13: #{tpu_custom_call.1} parent=1 // pred_fallthru
      _
    // Predicated region
    $region14: #{tpu_custom_call.1} parent=1 // pred_check
      _
    $region15: #{tpu_custom_call.1} parent=1 // pred_check_branch
      %41 = sbr.rel (0) target = $region17
    $region16: #{tpu_custom_call.1} parent=1 // pred_region
      %s43 = ssub.s32 2048, 2048
      %44 = vsyncadd [#allocation6], %s43
      %s45 = sshll.u32 [#allocation7], 4
      %s46 = int_to_ptr.vmem [resolvable:$true] %s45
      %51 = dma.hbm_to_vmem [thread:$0]  %s3, 2048, %s46, [#allocation6], 128, 128, 8
    $region17: #{tpu_custom_call.1} parent=1 // pred_fallthru
      _
    // Predicated region
    $region18: #{tpu_custom_call.1} parent=1 // pred_check
      _
    $region19: #{tpu_custom_call.1} parent=1 // pred_check_branch
      %53 = sbr.rel (0) target = $region21
    $region20: #{tpu_custom_call.1} parent=1 // pred_region
      _
    $region21: #{tpu_custom_call.1} parent=1 // pred_fallthru
      _
    // Predicated region
    $region22: #{tpu_custom_call.1} parent=1 // pred_check
      _
    $region23: #{tpu_custom_call.1} parent=1 // pred_check_branch
      %55 = sbr.rel (0) target = $region25
    $region24: #{tpu_custom_call.1} parent=1 // pred_region
      %56 = dma.done [#allocation3], 128
    $region25: #{tpu_custom_call.1} parent=1 // pred_fallthru
      _
    // Predicated region
    $region26: #{tpu_custom_call.1} parent=1 // pred_check
      _
    $region27: #{tpu_custom_call.1} parent=1 // pred_check_branch
      %58 = sbr.rel (0) target = $region29
    $region28: #{tpu_custom_call.1} parent=1 // pred_region
      %59 = dma.done [#allocation6], 2048
    $region29: #{tpu_custom_call.1} parent=1 // pred_fallthru
      _
    // Predicated region
    $region30: #{tpu_custom_call.1} parent=1 // pred_check
      _
    $region31: #{tpu_custom_call.1} parent=1 // pred_check_branch
      %61 = sbr.rel (0) target = $region33
    $region32: #{tpu_custom_call.1} parent=1 // pred_region
      %62 = dma.done [#allocation6], 2048
    $region33: #{tpu_custom_call.1} parent=1 // pred_fallthru
      _
    %v63 = vld [vmem:[#allocation2] sm:$0xff]
    %v64 = vld [vmem:[#allocation5] sm:$0xff]
    %v65 = vld [vmem:[#allocation5 + $0x8] sm:$0xff]
    %v66 = vld [vmem:[#allocation5 + $0x10] sm:$0xff]
    %v67 = vld [vmem:[#allocation5 + $0x18] sm:$0xff]
    %v68 = vld [vmem:[#allocation5 + $0x20] sm:$0xff]
    %v69 = vld [vmem:[#allocation5 + $0x28] sm:$0xff]
    %v70 = vld [vmem:[#allocation5 + $0x30] sm:$0xff]
    %v71 = vld [vmem:[#allocation5 + $0x38] sm:$0xff]
    %v72 = vld [vmem:[#allocation5 + $0x40] sm:$0xff]
    %v73 = vld [vmem:[#allocation5 + $0x48] sm:$0xff]
    %v74 = vld [vmem:[#allocation5 + $0x50] sm:$0xff]
    %v75 = vld [vmem:[#allocation5 + $0x58] sm:$0xff]
    %v76 = vld [vmem:[#allocation5 + $0x60] sm:$0xff]
    %v77 = vld [vmem:[#allocation5 + $0x68] sm:$0xff]
    %v78 = vld [vmem:[#allocation5 + $0x70] sm:$0xff]
    %v79 = vld [vmem:[#allocation5 + $0x78] sm:$0xff]
    %v80 = vld [vmem:[%s2] sm:$0x1]
    %v82 = vlaneseq
    %v83 = vshrl.u32 %v82, 7
    %v84 = vsub.s32 0, %v83
    %v85 = vrot.slane %v80, %v84
    %87 = vmatprep.subr.mxu0 0.0
    %88 = vmatpush1.msra.mxu0 %v64
    %89 = vmatprep.subr.mxu0 0.0
    %90 = vmatpush1.msra.mxu0 %v65
    %91 = vmatprep.subr.mxu0 0.0
    %92 = vmatpush1.msra.mxu0 %v66
    %93 = vmatprep.subr.mxu0 0.0
    %94 = vmatpush1.msra.mxu0 %v67
    %95 = vmatprep.subr.mxu0 0.0
    %96 = vmatpush1.msra.mxu0 %v68
    %97 = vmatprep.subr.mxu0 0.0
    %98 = vmatpush1.msra.mxu0 %v69
    %99 = vmatprep.subr.mxu0 0.0
    %100 = vmatpush1.msra.mxu0 %v70
    %101 = vmatprep.subr.mxu0 0.0
    %102 = vmatpush1.msra.mxu0 %v71
    %103 = vmatprep.subr.mxu0 0.0
    %104 = vmatpush1.msra.mxu0 %v72
    %105 = vmatprep.subr.mxu0 0.0
    %106 = vmatpush1.msra.mxu0 %v73
    %107 = vmatprep.subr.mxu0 0.0
    %108 = vmatpush1.msra.mxu0 %v74
    %109 = vmatprep.subr.mxu0 0.0
    %110 = vmatpush1.msra.mxu0 %v75
    %111 = vmatprep.subr.mxu0 0.0
    %112 = vmatpush1.msra.mxu0 %v76
    %113 = vmatprep.subr.mxu0 0.0
    %114 = vmatpush1.msra.mxu0 %v77
    %115 = vmatprep.subr.mxu0 0.0
    %116 = vmatpush1.msra.mxu0 %v78
    %117 = vmatprep.subr.mxu0 0.0
    %118 = vmatpush1.msra.mxu0 %v79
    %119 = vmatprep.subr.mxu0 0.0
    %120 = vmatpush1.msra.mxu0 0.0
    %121 = vmatprep.subr.mxu0 0.0
    %122 = vmatpush1.msra.mxu0 0.0
    %123 = vmatprep.subr.mxu0 0.0
    %124 = vmatpush1.msra.mxu0 0.0
    %125 = vmatprep.subr.mxu0 0.0
    %126 = vmatpush1.msra.mxu0 0.0
    %127 = vmatprep.subr.mxu0 0.0
    %128 = vmatpush1.msra.mxu0 0.0
    %129 = vmatprep.subr.mxu0 0.0
    %130 = vmatpush1.msra.mxu0 0.0
    %131 = vmatprep.subr.mxu0 0.0
    %132 = vmatpush1.msra.mxu0 0.0
    %133 = vmatprep.subr.mxu0 0.0
    %134 = vmatpush1.msra.mxu0 0.0
    %135 = vmatprep.subr.mxu0 0.0
    %136 = vmatpush1.msra.mxu0 0.0
    %137 = vmatprep.subr.mxu0 0.0
    %138 = vmatpush1.msra.mxu0 0.0
    %139 = vmatprep.subr.mxu0 0.0
    %140 = vmatpush1.msra.mxu0 0.0
    %141 = vmatprep.subr.mxu0 0.0
    %142 = vmatpush1.msra.mxu0 0.0
    %143 = vmatprep.subr.mxu0 0.0
    %144 = vmatpush1.msra.mxu0 0.0
    %145 = vmatprep.subr.mxu0 0.0
    %146 = vmatpush1.msra.mxu0 0.0
    %147 = vmatprep.subr.mxu0 0.0
    %148 = vmatpush1.msra.mxu0 0.0
    %149 = vmatprep.subr.mxu0 0.0
    %150 = vmatpush1.msra.mxu0 0.0
    %151 = vmatprep.mubr.f32.mxu0 0.0
    %152 = vmatmul.mubr.f32.gmra.mrb[0].mxu0 %v63
    %v153 = vpop.f32.mrb[0].mxu0
    %v154 = vadd.f32 %v85, %v153
    %v155 = vpop.f32.mrb[0].mxu0
    %156 = vdwg.mxu0
    %v157 = vxor.u32 %v154, 2147483648
    %v158 = vmul.f32 %v157, 1.442695
    %v159 = vpow.pop %v158
    %v160 = vadd.f32 %v159, 1.0
    %v161 = vrcp.pop %v160
    %v162 = vmul.f32 1.0, %v161
    %v163 = vld [vmem:[#allocation7] sm:$0xff]
    %v164 = vld [vmem:[#allocation7 + $0x8] sm:$0xff]
    %v165 = vld [vmem:[#allocation7 + $0x10] sm:$0xff]
    %v166 = vld [vmem:[#allocation7 + $0x18] sm:$0xff]
    %v167 = vld [vmem:[#allocation7 + $0x20] sm:$0xff]
    %v168 = vld [vmem:[#allocation7 + $0x28] sm:$0xff]
    %v169 = vld [vmem:[#allocation7 + $0x30] sm:$0xff]
    %v170 = vld [vmem:[#allocation7 + $0x38] sm:$0xff]
    %v171 = vld [vmem:[#allocation7 + $0x40] sm:$0xff]
    %v172 = vld [vmem:[#allocation7 + $0x48] sm:$0xff]
    %v173 = vld [vmem:[#allocation7 + $0x50] sm:$0xff]
    %v174 = vld [vmem:[#allocation7 + $0x58] sm:$0xff]
    %v175 = vld [vmem:[#allocation7 + $0x60] sm:$0xff]
    %v176 = vld [vmem:[#allocation7 + $0x68] sm:$0xff]
    %v177 = vld [vmem:[#allocation7 + $0x70] sm:$0xff]
    %v178 = vld [vmem:[#allocation7 + $0x78] sm:$0xff]
    %v179 = vld [vmem:[%s4] sm:$0x1]
    %v181 = vlaneseq
    %v182 = vshrl.u32 %v181, 7
    %v183 = vsub.s32 0, %v182
    %v184 = vrot.slane %v179, %v183
    %186 = vmatprep.subr.mxu0 0.0
    %187 = vmatpush1.msra.mxu0 %v163
    %188 = vmatprep.subr.mxu0 0.0
    %189 = vmatpush1.msra.mxu0 %v164
    %190 = vmatprep.subr.mxu0 0.0
    %191 = vmatpush1.msra.mxu0 %v165
    %192 = vmatprep.subr.mxu0 0.0
    %193 = vmatpush1.msra.mxu0 %v166
    %194 = vmatprep.subr.mxu0 0.0
    %195 = vmatpush1.msra.mxu0 %v167
    %196 = vmatprep.subr.mxu0 0.0
    %197 = vmatpush1.msra.mxu0 %v168
    %198 = vmatprep.subr.mxu0 0.0
    %199 = vmatpush1.msra.mxu0 %v169
    %200 = vmatprep.subr.mxu0 0.0
    %201 = vmatpush1.msra.mxu0 %v170
    %202 = vmatprep.subr.mxu0 0.0
    %203 = vmatpush1.msra.mxu0 %v171
    %204 = vmatprep.subr.mxu0 0.0
    %205 = vmatpush1.msra.mxu0 %v172
    %206 = vmatprep.subr.mxu0 0.0
    %207 = vmatpush1.msra.mxu0 %v173
    %208 = vmatprep.subr.mxu0 0.0
    %209 = vmatpush1.msra.mxu0 %v174
    %210 = vmatprep.subr.mxu0 0.0
    %211 = vmatpush1.msra.mxu0 %v175
    %212 = vmatprep.subr.mxu0 0.0
    %213 = vmatpush1.msra.mxu0 %v176
    %214 = vmatprep.subr.mxu0 0.0
    %215 = vmatpush1.msra.mxu0 %v177
    %216 = vmatprep.subr.mxu0 0.0
    %217 = vmatpush1.msra.mxu0 %v178
    %218 = vmatprep.subr.mxu0 0.0
    %219 = vmatpush1.msra.mxu0 0.0
    %220 = vmatprep.subr.mxu0 0.0
    %221 = vmatpush1.msra.mxu0 0.0
    %222 = vmatprep.subr.mxu0 0.0
    %223 = vmatpush1.msra.mxu0 0.0
    %224 = vmatprep.subr.mxu0 0.0
    %225 = vmatpush1.msra.mxu0 0.0
    %226 = vmatprep.subr.mxu0 0.0
    %227 = vmatpush1.msra.mxu0 0.0
    %228 = vmatprep.subr.mxu0 0.0
    %229 = vmatpush1.msra.mxu0 0.0
    %230 = vmatprep.subr.mxu0 0.0
    %231 = vmatpush1.msra.mxu0 0.0
    %232 = vmatprep.subr.mxu0 0.0
    %233 = vmatpush1.msra.mxu0 0.0
    %234 = vmatprep.subr.mxu0 0.0
    %235 = vmatpush1.msra.mxu0 0.0
    %236 = vmatprep.subr.mxu0 0.0
    %237 = vmatpush1.msra.mxu0 0.0
    %238 = vmatprep.subr.mxu0 0.0
    %239 = vmatpush1.msra.mxu0 0.0
    %240 = vmatprep.subr.mxu0 0.0
    %241 = vmatpush1.msra.mxu0 0.0
    %242 = vmatprep.subr.mxu0 0.0
    %243 = vmatpush1.msra.mxu0 0.0
    %244 = vmatprep.subr.mxu0 0.0
    %245 = vmatpush1.msra.mxu0 0.0
    %246 = vmatprep.subr.mxu0 0.0
    %247 = vmatpush1.msra.mxu0 0.0
    %248 = vmatprep.subr.mxu0 0.0
    %249 = vmatpush1.msra.mxu0 0.0
    %250 = vmatprep.mubr.f32.mxu0 0.0
    %251 = vmatmul.mubr.f32.gmra.mrb[0].mxu0 %v162
    %v252 = vpop.f32.mrb[0].mxu0
    %v253 = vadd.f32 %v184, %v252
    %v254 = vpop.f32.mrb[0].mxu0
    %255 = vdwg.mxu0
    %v256 = vxor.u32 %v253, 2147483648
    %v257 = vmul.f32 %v256, 1.442695
    %v258 = vpow.pop %v257
    %v259 = vadd.f32 %v258, 1.0
    %v260 = vrcp.pop %v259
    %v261 = vmul.f32 1.0, %v260
    %262 = vst [vmem:[#allocation8] sm:$0xff] %v261
    %263 = vst [vmem:[#allocation9] sm:$0xff] %v162
    // Predicated region
    $region34: #{tpu_custom_call.1} parent=1 // pred_check
      _
    $region35: #{tpu_custom_call.1} parent=1 // pred_check_branch
      %265 = sbr.rel (0) target = $region37
    $region36: #{tpu_custom_call.1} parent=1 // pred_region
      %s267 = ssub.s32 128, 128
      %268 = vsyncadd [#allocation4], %s267
      %s270 = sshll.u32 [#allocation8], 4
      %s271 = int_to_ptr.vmem [resolvable:$true] %s270
      %273 = dma.vmem_to_hbm [thread:$0]  %s271, 128, %s5, [#allocation4]
    $region37: #{tpu_custom_call.1} parent=1 // pred_fallthru
      _
    // Predicated region
    $region38: #{tpu_custom_call.1} parent=1 // pred_check
      _
    $region39: #{tpu_custom_call.1} parent=1 // pred_check_branch
      %275 = sbr.rel (0) target = $region41
    $region40: #{tpu_custom_call.1} parent=1 // pred_region
      %s277 = ssub.s32 128, 128
      %278 = vsyncadd [#allocation10], %s277
      %s280 = sshll.u32 [#allocation9], 4
      %s281 = int_to_ptr.vmem [resolvable:$true] %s280
      %283 = dma.vmem_to_hbm [thread:$0]  %s281, 128, %s6, [#allocation10]
    $region41: #{tpu_custom_call.1} parent=1 // pred_fallthru
      _
    // Predicated region
    $region42: #{tpu_custom_call.1} parent=1 // pred_check
      _
    $region43: #{tpu_custom_call.1} parent=1 // pred_check_branch
      %285 = sbr.rel (0) target = $region45
    $region44: #{tpu_custom_call.1} parent=1 // pred_region
      %286 = dma.done [#allocation4], 128
    $region45: #{tpu_custom_call.1} parent=1 // pred_fallthru
      _
    // Predicated region
    $region46: #{tpu_custom_call.1} parent=1 // pred_check
      _
    $region47: #{tpu_custom_call.1} parent=1 // pred_check_branch
      %288 = sbr.rel (0) target = $region49
    $region48: #{tpu_custom_call.1} parent=1 // pred_region
      %289 = dma.done [#allocation10], 128
    $region49: #{tpu_custom_call.1} parent=1 // pred_fallthru
      _
    %290 = vsyncpa [#allocation3], 1
    %291 = vsyncpa [#allocation6], 1
    %292 = vsyncpa [#allocation4], 1
    %293 = vsyncpa [#allocation10], 1

</llo_original>
